<compile_context>
chip_gen: v5e
topology: v5e:2x2
jax: 0.10.0
libtpu: 0.0.40
codegen_flags: <defaults>
</compile_context>

<pallas_src>
import functools

import jax
import jax.numpy as jnp
from jax import lax
from jax.experimental import pallas as pl
from jax.experimental.pallas import tpu as pltpu


def _round_up(x, m):
    return ((x + m - 1) // m) * m


def _margin_deviance_kernel(x_tile_ref, x_all_ref, tcol_ref, trow_ref, o_ref,
                            *, n_valid):
    tm = x_tile_ref.shape[0]
    n_pad = x_all_ref.shape[0]
    row0 = pl.program_id(0) * tm

    # (TM, N) similarity slab: bf16 operands, f32 accumulation on the MXU.
    sim = lax.dot_general(
        x_tile_ref[...], x_all_ref[...],
        dimension_numbers=(((1,), (1,)), ((), ())),
        preferred_element_type=jnp.float32,
    )

    tcol = tcol_ref[...]                                   # (TM, 1) int32
    trow = trow_ref[...]                                   # (1, N)  int32
    same = tcol == trow                                    # (TM, N) bool

    # One full-size iota; row indices stay as a (TM, 1) column.
    col_ids = lax.broadcasted_iota(jnp.int32, (tm, n_pad), 1)
    local_rows = lax.broadcasted_iota(jnp.int32, (tm, 1), 0)
    global_rows = local_rows + row0                        # (TM, 1)
    diag = col_ids == global_rows                          # (TM, N)
    col_valid = col_ids < n_valid                          # mask out padded cols

    pos = jnp.logical_and(jnp.logical_and(same, jnp.logical_not(diag)), col_valid)
    neg = jnp.logical_and(jnp.logical_not(same), col_valid)

    zero = jnp.zeros_like(sim)
    one = jnp.ones_like(sim)
    sim2 = sim * sim

    # Single-pass masked stats (counts, sums, sums of squares).
    pos_cnt = jnp.sum(jnp.where(pos, one, zero), axis=-1, keepdims=True)
    neg_cnt = jnp.sum(jnp.where(neg, one, zero), axis=-1, keepdims=True)
    pos_sum = jnp.sum(jnp.where(pos, sim, zero), axis=-1, keepdims=True)
    neg_sum = jnp.sum(jnp.where(neg, sim, zero), axis=-1, keepdims=True)
    pos_sq = jnp.sum(jnp.where(pos, sim2, zero), axis=-1, keepdims=True)
    neg_sq = jnp.sum(jnp.where(neg, sim2, zero), axis=-1, keepdims=True)

    safe_pos_cnt = jnp.maximum(pos_cnt, 1.0)
    safe_neg_cnt = jnp.maximum(neg_cnt, 1.0)
    pos_mean = pos_sum / safe_pos_cnt
    neg_mean = neg_sum / safe_neg_cnt
    pos_std = jnp.sqrt(jnp.maximum(pos_sq / safe_pos_cnt - pos_mean * pos_mean, 0.0))
    neg_std = jnp.sqrt(jnp.maximum(neg_sq / safe_neg_cnt - neg_mean * neg_mean, 0.0))

    denom = pos_std + neg_std
    safe_denom = jnp.where(denom > 0.0, denom, 1.0)
    inter = (neg_std * pos_mean + pos_std * neg_mean) / safe_denom
    inter = 0.8 * inter + 0.1                              # (TM, 1)

    # Shared full-size pass: d, |d|, one exp; exp(-40|d|) via two squarings.
    d = sim - inter
    ad = jnp.abs(d)
    e10 = jnp.exp(-10.0 * ad)                              # EUP: one exp / element
    e40 = e10 * e10
    e40 = e40 * e40                                        # = exp(-40*|d|)
    # Overflow-safe softplus: log(1+exp(z)) = max(z, 0) + log(1 + exp(-|z|)).
    sp_pos = jnp.maximum(-10.0 * d, 0.0) + jnp.log(1.0 + e10)
    sp_neg = jnp.maximum(40.0 * d, 0.0) + jnp.log(1.0 + e40)

    # min over positives == pos_pair[0] after sorting in the reference.
    min_pos = jnp.min(jnp.where(pos, sim, jnp.inf), axis=-1, keepdims=True)
    keep = jnp.logical_and(neg, sim > (min_pos - 0.05))
    keep_cnt = jnp.sum(jnp.where(keep, one, zero), axis=-1, keepdims=True)
    safe_keep_cnt = jnp.maximum(keep_cnt, 1.0)

    pos_loss = 0.2 * jnp.sum(jnp.where(pos, sp_pos, zero), axis=-1,
                             keepdims=True) / safe_pos_cnt
    neg_loss = 0.05 * jnp.sum(jnp.where(keep, sp_neg, zero), axis=-1,
                              keepdims=True) / safe_keep_cnt

    # Rows that are padding, or degenerate (no positives / no negatives),
    # contribute zero.  TODO(synk): the PyTorch reference is undefined for
    # singleton classes (resize would fail); we emit 0 for such rows.
    row_valid = jnp.logical_and(global_rows < n_valid, pos_cnt > 0.0)
    row_valid = jnp.logical_and(row_valid, neg_cnt > 0.0)
    o_ref[...] = jnp.where(row_valid, pos_loss + neg_loss, 0.0)   # (TM, 1)


def margin_deviance_loss(inputs, targets, *, block_rows=128):
    """inputs: (N, D) float embeddings; targets: (N,) int labels (>= 0)."""
    n, d = inputs.shape

    # Pick a row-tile size: multiple of 8, no larger than the padded batch.
    tm = min(_round_up(block_rows, 8), _round_up(n, 8))
    n_pad = _round_up(n, tm)
    n_tiles = n_pad // tm

    # bf16 embeddings (halves HBM/VMEM traffic, doubles MXU rate); pad rows.
    x = jnp.pad(inputs.astype(jnp.bfloat16), ((0, n_pad - n), (0, 0)))
    t = jnp.pad(targets.astype(jnp.int32), (0, n_pad - n), constant_values=-1)
    tcol = t.reshape(n_pad, 1)
    trow = t.reshape(1, n_pad)

    row_losses = pl.pallas_call(
        functools.partial(_margin_deviance_kernel, n_valid=n),
        out_shape=jax.ShapeDtypeStruct((n_pad, 1), jnp.float32),
        grid=(n_tiles,),
        in_specs=[
            pl.BlockSpec((tm, d), lambda i: (i, 0)),       # row strip of X
            pl.BlockSpec((n_pad, d), lambda i: (0, 0)),    # full X (RHS)
            pl.BlockSpec((tm, 1), lambda i: (i, 0)),       # labels of the strip
            pl.BlockSpec((1, n_pad), lambda i: (0, 0)),    # all labels (row)
        ],
        out_specs=pl.BlockSpec((tm, 1), lambda i: (i, 0)), # per-row losses
        compiler_params=pltpu.CompilerParams(
            dimension_semantics=("parallel",),             # megacore on v7x
            vmem_limit_bytes=48 * 1024 * 1024,             # fits v7x's 64 MiB
        ),
    )(x, x, tcol, trow)

    return jnp.sum(row_losses) / jnp.float32(n)


if __name__ == "__main__":
    key = jax.random.PRNGKey(0)
    n, d = 60, 32                       # 4 classes x 15 samples, hidden=32
    x = jax.random.normal(key, (n, d), dtype=jnp.float32)
    x = x / jnp.linalg.norm(x, axis=-1, keepdims=True)     # L2-normalized embeddings
    targets = jnp.repeat(jnp.arange(4, dtype=jnp.int32), 15)

    # block_rows=16 -> 4 row tiles + padded rows, exercising tiling & masking.
    loss = margin_deviance_loss(x, targets, block_rows=16)
    loss = jax.block_until_ready(loss)
    assert bool(jnp.isfinite(loss)), f"non-finite loss: {loss}"
    print("KERNEL_OK")
</pallas_src>

<mosaic_0001>
module attributes {stable_mosaic.version = 11 : i64} {
  func.func @_margin_deviance_kernel(%arg0: i32, %arg1: memref<16x32xbf16, #tpu.memory_space<vmem>>, %arg2: memref<64x32xbf16, #tpu.memory_space<vmem>>, %arg3: memref<16x1xi32, #tpu.memory_space<vmem>>, %arg4: memref<1x64xi32, #tpu.memory_space<vmem>>, %arg5: memref<16x1xf32, #tpu.memory_space<vmem>>) attributes {dimension_semantics = [#tpu.dimension_semantics<parallel>], iteration_bounds = array<i64: 4>, scalar_prefetch = 0 : i64, scratch_operands = 0 : i64, tpu.core_type = #tpu.core_type<tc>, window_params = [{transform_indices = @transform_0, window_bounds = array<i64: 16, 32>}, {pipeline_mode = #tpu.pipeline_mode<synchronous>, transform_indices = @transform_1, window_bounds = array<i64: 64, 32>}, {transform_indices = @transform_2, window_bounds = array<i64: 16, 1>}, {pipeline_mode = #tpu.pipeline_mode<synchronous>, transform_indices = @transform_3, window_bounds = array<i64: 1, 64>}, {transform_indices = @transform_4, window_bounds = array<i64: 16, 1>}]} {
    %c16_i32 = arith.constant 16 : i32
    %0 = arith.muli %arg0, %c16_i32 : i32
    %c0 = arith.constant 0 : index
    %c0_0 = arith.constant 0 : index
    %1 = vector.load %arg1[%c0, %c0_0] : memref<16x32xbf16, #tpu.memory_space<vmem>>, vector<16x32xbf16>
    %c0_1 = arith.constant 0 : index
    %c0_2 = arith.constant 0 : index
    %2 = vector.load %arg2[%c0_1, %c0_2] : memref<64x32xbf16, #tpu.memory_space<vmem>>, vector<64x32xbf16>
    %cst = arith.constant dense<0.000000e+00> : vector<16x64xf32>
    %3 = tpu.matmul %1, %2, %cst {dimension_numbers = #tpu.dot_dimension_numbers<[1], [1], [0], [0], [0, 0, 1, 0], [], []>} : vector<16x32xbf16>, vector<64x32xbf16>, vector<16x64xf32> -> vector<16x64xf32>
    %c0_3 = arith.constant 0 : index
    %c0_4 = arith.constant 0 : index
    %4 = vector.load %arg3[%c0_3, %c0_4] : memref<16x1xi32, #tpu.memory_space<vmem>>, vector<16x1xi32>
    %c0_5 = arith.constant 0 : index
    %c0_6 = arith.constant 0 : index
    %5 = vector.load %arg4[%c0_5, %c0_6] : memref<1x64xi32, #tpu.memory_space<vmem>>, vector<1x64xi32>
    %6 = vector.broadcast %4 : vector<16x1xi32> to vector<16x64xi32>
    %7 = vector.broadcast %5 : vector<1x64xi32> to vector<16x64xi32>
    %8 = arith.cmpi eq, %6, %7 : vector<16x64xi32>
    %9 = tpu.iota {dimensions = array<i32: 1>} : vector<16x64xi32>
    %10 = tpu.iota {dimensions = array<i32: 0>} : vector<16x1xi32>
    %11 = vector.broadcast %0 : i32 to vector<16x1xi32>
    %12 = arith.addi %10, %11 : vector<16x1xi32>
    %13 = vector.broadcast %12 : vector<16x1xi32> to vector<16x64xi32>
    %14 = arith.cmpi eq, %9, %13 : vector<16x64xi32>
    %c60_i32 = arith.constant 60 : i32
    %15 = vector.broadcast %c60_i32 : i32 to vector<16x64xi32>
    %16 = arith.cmpi slt, %9, %15 : vector<16x64xi32>
    %cst_7 = arith.constant dense<true> : vector<16x64xi1>
    %17 = arith.xori %14, %cst_7 : vector<16x64xi1>
    %18 = arith.andi %8, %17 : vector<16x64xi1>
    %19 = arith.andi %18, %16 : vector<16x64xi1>
    %cst_8 = arith.constant dense<true> : vector<16x64xi1>
    %20 = arith.xori %8, %cst_8 : vector<16x64xi1>
    %21 = arith.andi %20, %16 : vector<16x64xi1>
    %cst_9 = arith.constant 0.000000e+00 : f32
    %22 = vector.broadcast %cst_9 : f32 to vector<16x64xf32>
    %cst_10 = arith.constant 1.000000e+00 : f32
    %23 = vector.broadcast %cst_10 : f32 to vector<16x64xf32>
    %24 = arith.mulf %3, %3 : vector<16x64xf32>
    %25 = arith.select %19, %23, %22 : vector<16x64xi1>, vector<16x64xf32>
    %cst_11 = arith.constant dense<0.000000e+00> : vector<16xf32>
    %26 = vector.multi_reduction <add>, %25, %cst_11 [1] : vector<16x64xf32> to vector<16xf32>
    %27 = vector.shape_cast %26 : vector<16xf32> to vector<16x1xf32>
    %28 = arith.select %21, %23, %22 : vector<16x64xi1>, vector<16x64xf32>
    %cst_12 = arith.constant dense<0.000000e+00> : vector<16xf32>
    %29 = vector.multi_reduction <add>, %28, %cst_12 [1] : vector<16x64xf32> to vector<16xf32>
    %30 = vector.shape_cast %29 : vector<16xf32> to vector<16x1xf32>
    %31 = arith.select %19, %3, %22 : vector<16x64xi1>, vector<16x64xf32>
    %cst_13 = arith.constant dense<0.000000e+00> : vector<16xf32>
    %32 = vector.multi_reduction <add>, %31, %cst_13 [1] : vector<16x64xf32> to vector<16xf32>
    %33 = vector.shape_cast %32 : vector<16xf32> to vector<16x1xf32>
    %34 = arith.select %21, %3, %22 : vector<16x64xi1>, vector<16x64xf32>
    %cst_14 = arith.constant dense<0.000000e+00> : vector<16xf32>
    %35 = vector.multi_reduction <add>, %34, %cst_14 [1] : vector<16x64xf32> to vector<16xf32>
    %36 = vector.shape_cast %35 : vector<16xf32> to vector<16x1xf32>
    %37 = arith.select %19, %24, %22 : vector<16x64xi1>, vector<16x64xf32>
    %cst_15 = arith.constant dense<0.000000e+00> : vector<16xf32>
    %38 = vector.multi_reduction <add>, %37, %cst_15 [1] : vector<16x64xf32> to vector<16xf32>
    %39 = vector.shape_cast %38 : vector<16xf32> to vector<16x1xf32>
    %40 = arith.select %21, %24, %22 : vector<16x64xi1>, vector<16x64xf32>
    %cst_16 = arith.constant dense<0.000000e+00> : vector<16xf32>
    %41 = vector.multi_reduction <add>, %40, %cst_16 [1] : vector<16x64xf32> to vector<16xf32>
    %42 = vector.shape_cast %41 : vector<16xf32> to vector<16x1xf32>
    %cst_17 = arith.constant 1.000000e+00 : f32
    %43 = vector.broadcast %cst_17 : f32 to vector<16x1xf32>
    %44 = arith.maximumf %27, %43 : vector<16x1xf32>
    %cst_18 = arith.constant 1.000000e+00 : f32
    %45 = vector.broadcast %cst_18 : f32 to vector<16x1xf32>
    %46 = arith.maximumf %30, %45 : vector<16x1xf32>
    %47 = arith.divf %33, %44 : vector<16x1xf32>
    %48 = arith.divf %36, %46 : vector<16x1xf32>
    %49 = arith.divf %39, %44 : vector<16x1xf32>
    %50 = arith.mulf %47, %47 : vector<16x1xf32>
    %51 = arith.subf %49, %50 : vector<16x1xf32>
    %cst_19 = arith.constant 0.000000e+00 : f32
    %52 = vector.broadcast %cst_19 : f32 to vector<16x1xf32>
    %53 = arith.maximumf %51, %52 : vector<16x1xf32>
    %54 = math.sqrt %53 : vector<16x1xf32>
    %55 = arith.divf %42, %46 : vector<16x1xf32>
    %56 = arith.mulf %48, %48 : vector<16x1xf32>
    %57 = arith.subf %55, %56 : vector<16x1xf32>
    %cst_20 = arith.constant 0.000000e+00 : f32
    %58 = vector.broadcast %cst_20 : f32 to vector<16x1xf32>
    %59 = arith.maximumf %57, %58 : vector<16x1xf32>
    %60 = math.sqrt %59 : vector<16x1xf32>
    %61 = arith.addf %54, %60 : vector<16x1xf32>
    %cst_21 = arith.constant 0.000000e+00 : f32
    %62 = vector.broadcast %cst_21 : f32 to vector<16x1xf32>
    %63 = arith.cmpf ogt, %61, %62 : vector<16x1xf32>
    %cst_22 = arith.constant 1.000000e+00 : f32
    %64 = vector.broadcast %cst_22 : f32 to vector<16x1xf32>
    %65 = arith.select %63, %61, %64 : vector<16x1xi1>, vector<16x1xf32>
    %66 = arith.mulf %60, %47 : vector<16x1xf32>
    %67 = arith.mulf %54, %48 : vector<16x1xf32>
    %68 = arith.addf %66, %67 : vector<16x1xf32>
    %69 = arith.divf %68, %65 : vector<16x1xf32>
    %cst_23 = arith.constant 8.000000e-01 : f32
    %70 = vector.broadcast %cst_23 : f32 to vector<16x1xf32>
    %71 = arith.mulf %70, %69 : vector<16x1xf32>
    %cst_24 = arith.constant 1.000000e-01 : f32
    %72 = vector.broadcast %cst_24 : f32 to vector<16x1xf32>
    %73 = arith.addf %71, %72 : vector<16x1xf32>
    %74 = vector.broadcast %73 : vector<16x1xf32> to vector<16x64xf32>
    %75 = arith.subf %3, %74 : vector<16x64xf32>
    %76 = math.absf %75 : vector<16x64xf32>
    %cst_25 = arith.constant -1.000000e+01 : f32
    %77 = vector.broadcast %cst_25 : f32 to vector<16x64xf32>
    %78 = arith.mulf %77, %76 : vector<16x64xf32>
    %79 = math.exp %78 : vector<16x64xf32>
    %80 = arith.mulf %79, %79 : vector<16x64xf32>
    %81 = arith.mulf %80, %80 : vector<16x64xf32>
    %cst_26 = arith.constant -1.000000e+01 : f32
    %82 = vector.broadcast %cst_26 : f32 to vector<16x64xf32>
    %83 = arith.mulf %82, %75 : vector<16x64xf32>
    %cst_27 = arith.constant 0.000000e+00 : f32
    %84 = vector.broadcast %cst_27 : f32 to vector<16x64xf32>
    %85 = arith.maximumf %83, %84 : vector<16x64xf32>
    %cst_28 = arith.constant 1.000000e+00 : f32
    %86 = vector.broadcast %cst_28 : f32 to vector<16x64xf32>
    %87 = arith.addf %86, %79 : vector<16x64xf32>
    %88 = math.log %87 : vector<16x64xf32>
    %89 = arith.addf %85, %88 : vector<16x64xf32>
    %cst_29 = arith.constant 4.000000e+01 : f32
    %90 = vector.broadcast %cst_29 : f32 to vector<16x64xf32>
    %91 = arith.mulf %90, %75 : vector<16x64xf32>
    %cst_30 = arith.constant 0.000000e+00 : f32
    %92 = vector.broadcast %cst_30 : f32 to vector<16x64xf32>
    %93 = arith.maximumf %91, %92 : vector<16x64xf32>
    %cst_31 = arith.constant 1.000000e+00 : f32
    %94 = vector.broadcast %cst_31 : f32 to vector<16x64xf32>
    %95 = arith.addf %94, %81 : vector<16x64xf32>
    %96 = math.log %95 : vector<16x64xf32>
    %97 = arith.addf %93, %96 : vector<16x64xf32>
    %cst_32 = arith.constant 0x7F800000 : f32
    %98 = vector.broadcast %cst_32 : f32 to vector<16x64xf32>
    %99 = arith.select %19, %3, %98 : vector<16x64xi1>, vector<16x64xf32>
    %cst_33 = arith.constant dense<0x7F800000> : vector<16xf32>
    %100 = vector.multi_reduction <minimumf>, %99, %cst_33 [1] : vector<16x64xf32> to vector<16xf32>
    %101 = vector.shape_cast %100 : vector<16xf32> to vector<16x1xf32>
    %cst_34 = arith.constant 5.000000e-02 : f32
    %102 = vector.broadcast %cst_34 : f32 to vector<16x1xf32>
    %103 = arith.subf %101, %102 : vector<16x1xf32>
    %104 = vector.broadcast %103 : vector<16x1xf32> to vector<16x64xf32>
    %105 = arith.cmpf ogt, %3, %104 : vector<16x64xf32>
    %106 = arith.andi %21, %105 : vector<16x64xi1>
    %107 = arith.select %106, %23, %22 : vector<16x64xi1>, vector<16x64xf32>
    %cst_35 = arith.constant dense<0.000000e+00> : vector<16xf32>
    %108 = vector.multi_reduction <add>, %107, %cst_35 [1] : vector<16x64xf32> to vector<16xf32>
    %109 = vector.shape_cast %108 : vector<16xf32> to vector<16x1xf32>
    %cst_36 = arith.constant 1.000000e+00 : f32
    %110 = vector.broadcast %cst_36 : f32 to vector<16x1xf32>
    %111 = arith.maximumf %109, %110 : vector<16x1xf32>
    %112 = arith.select %19, %89, %22 : vector<16x64xi1>, vector<16x64xf32>
    %cst_37 = arith.constant dense<0.000000e+00> : vector<16xf32>
    %113 = vector.multi_reduction <add>, %112, %cst_37 [1] : vector<16x64xf32> to vector<16xf32>
    %114 = vector.shape_cast %113 : vector<16xf32> to vector<16x1xf32>
    %cst_38 = arith.constant 2.000000e-01 : f32
    %115 = vector.broadcast %cst_38 : f32 to vector<16x1xf32>
    %116 = arith.mulf %115, %114 : vector<16x1xf32>
    %117 = arith.divf %116, %44 : vector<16x1xf32>
    %118 = arith.select %106, %97, %22 : vector<16x64xi1>, vector<16x64xf32>
    %cst_39 = arith.constant dense<0.000000e+00> : vector<16xf32>
    %119 = vector.multi_reduction <add>, %118, %cst_39 [1] : vector<16x64xf32> to vector<16xf32>
    %120 = vector.shape_cast %119 : vector<16xf32> to vector<16x1xf32>
    %cst_40 = arith.constant 5.000000e-02 : f32
    %121 = vector.broadcast %cst_40 : f32 to vector<16x1xf32>
    %122 = arith.mulf %121, %120 : vector<16x1xf32>
    %123 = arith.divf %122, %111 : vector<16x1xf32>
    %c60_i32_41 = arith.constant 60 : i32
    %124 = vector.broadcast %c60_i32_41 : i32 to vector<16x1xi32>
    %125 = arith.cmpi slt, %12, %124 : vector<16x1xi32>
    %cst_42 = arith.constant 0.000000e+00 : f32
    %126 = vector.broadcast %cst_42 : f32 to vector<16x1xf32>
    %127 = arith.cmpf ogt, %27, %126 : vector<16x1xf32>
    %128 = arith.andi %125, %127 : vector<16x1xi1>
    %cst_43 = arith.constant 0.000000e+00 : f32
    %129 = vector.broadcast %cst_43 : f32 to vector<16x1xf32>
    %130 = arith.cmpf ogt, %30, %129 : vector<16x1xf32>
    %131 = arith.andi %128, %130 : vector<16x1xi1>
    %132 = arith.addf %117, %123 : vector<16x1xf32>
    %cst_44 = arith.constant 0.000000e+00 : f32
    %133 = vector.broadcast %cst_44 : f32 to vector<16x1xf32>
    %134 = arith.select %131, %132, %133 : vector<16x1xi1>, vector<16x1xf32>
    %c0_45 = arith.constant 0 : index
    %c0_46 = arith.constant 0 : index
    %135 = vector.load %arg5[%c0_45, %c0_46] : memref<16x1xf32, #tpu.memory_space<vmem>>, vector<16x1xf32>
    tpu.vector_store %arg5[%c0_45, %c0_46], %134 {strides = array<i32>} : memref<16x1xf32, #tpu.memory_space<vmem>>, vector<16x1xf32>,
    return
  }
  func.func @transform_0(%arg0: i32) -> (i32, i32) {
    %c0_i32 = arith.constant 0 : i32
    %c0_i32_0 = arith.constant 0 : i32
    return %arg0, %c0_i32 : i32, i32
  }
  func.func @transform_1(%arg0: i32) -> (i32, i32) {
    %c0_i32 = arith.constant 0 : i32
    %c0_i32_0 = arith.constant 0 : i32
    %c0_i32_1 = arith.constant 0 : i32
    return %c0_i32, %c0_i32_0 : i32, i32
  }
  func.func @transform_2(%arg0: i32) -> (i32, i32) {
    %c0_i32 = arith.constant 0 : i32
    %c0_i32_0 = arith.constant 0 : i32
    return %arg0, %c0_i32 : i32, i32
  }
  func.func @transform_3(%arg0: i32) -> (i32, i32) {
    %c0_i32 = arith.constant 0 : i32
    %c0_i32_0 = arith.constant 0 : i32
    %c0_i32_1 = arith.constant 0 : i32
    return %c0_i32, %c0_i32_0 : i32, i32
  }
  func.func @transform_4(%arg0: i32) -> (i32, i32) {
    %c0_i32 = arith.constant 0 : i32
    %c0_i32_0 = arith.constant 0 : i32
    return %arg0, %c0_i32 : i32, i32
  }
}

</mosaic_0001>

<llo_original>
// kernel: tpu_custom_call.1
$region0: #{tpu_custom_call.1}
  #allocation0 [shape = 'u32[]', space=smem, size = 0x4, offset = 0x4, fixed_abs, tag = 'smem constant byte address 0x4 - core index']
  #allocation1 [shape = 'u32[72,128]{1,0:T(1,128)}', space=vmem, size = 0x9000, scoped, tag = 'internal scratch']
  %s0 = inlined_call_operand.vmem [shape: bf16[64,32], index: 0, kind: input, shape index: {}]
  %s1 = inlined_call_operand.vmem [shape: bf16[64,32], index: 1, kind: input, shape index: {}]
  %s2 = inlined_call_operand.vmem [shape: s32[64,1], index: 2, kind: input, shape index: {}]
  %s3 = inlined_call_operand.vmem [shape: s32[1,64], index: 3, kind: input, shape index: {}]
  %s4 = inlined_call_operand.vmem [shape: f32[64,1], index: 4, kind: output, shape index: {}]
  %s5 = sld [smem:[#allocation0]]
  $region49: #{tpu_custom_call.1} parent=0
    _
  %s7 = ssub.s32 1, %s5
  %s8 = scalar_select 0, %s7, %s5
  loop: start=0, step=1, limit=6
  $region2: #{tpu_custom_call.1} parent=0 // loop_pre_header
    _
  $region3: #{tpu_custom_call.1} parent=0 // loop_header
    %s10 = sphi 0, %s14
    %p11 = scmp.ge.s32.totalorder %s10, 6
    %s20 = sphi 0, %s22
    %s23 = sphi 0, %s20
    %s24 = sphi 0, %s23
    %s40 = sphi 0, %s24
    %s44 = sphi 0, %s44
    %s46 = sphi 0, %s44
    %s47 = sphi 0, %s46
    %s61 = sphi 0, %s47
    %s67 = sphi 0, %s69
    %s70 = sphi 0, %s67
    %s71 = sphi 0, %s70
    %s87 = sphi 0, %s71
    %s91 = sphi 0, %s91
    %s93 = sphi 0, %s91
    %s94 = sphi 0, %s93
    %s108 = sphi 0, %s94
    %s114 = sphi 0, %s116
    %s117 = sphi 0, %s114
    %s118 = sphi 0, %s117
    %s134 = sphi 0, %s118
  $region4: #{tpu_custom_call.1} parent=0 // loop_header_branch
    %13 = sbr.rel (%p11) target = $region8
  $region5: #{tpu_custom_call.1} parent=0 // loop_body
    %s15 = ssub.s32 %s10, 1
    %s16 = ssub.s32 %s10, 2
    %s17 = sadd.s32 %s10, 1
    %s18 = ssub.s32 %s10, %s17
    %p19 = scmp.eq.s32.totalorder %s18, 0
    %s21 = sadd.s32 %s20, 1
    %s22 = scalar_select %p19, %s20, %s21
    %p25 = pneg %p19
    %p26 = scmp.eq.s32.totalorder %s10, 3
    %p27 = por %p25, %p26
    %p28 = scmp.ne.s32.totalorder %s20, %s23
    %p29 = scmp.eq.s32.totalorder %s10, 0
    %p30 = por %p28, %p29
    %p31 = scmp.ne.s32.totalorder %s20, %s23
    %p32 = scmp.eq.s32.totalorder %s15, 3
    %p33 = por %p31, %p32
    %p34 = scmp.ne.s32.totalorder %s23, %s24
    %p35 = scmp.eq.s32.totalorder %s15, 0
    %p36 = por %p34, %p35
    %p37 = scmp.ne.s32.totalorder %s23, %s24
    %p38 = scmp.eq.s32.totalorder %s16, 3
    %p39 = por %p37, %p38
    %p41 = scmp.ne.s32.totalorder %s24, %s40
    %p42 = scmp.eq.s32.totalorder %s16, 0
    %p43 = por %p41, %p42
    %s45 = sadd.s32 %s44, 1
    %p48 = scmp.eq.s32.totalorder %s10, 3
    %p49 = scmp.ne.s32.totalorder %s44, %s46
    %p50 = scmp.eq.s32.totalorder %s10, 0
    %p51 = por %p49, %p50
    %p52 = scmp.ne.s32.totalorder %s44, %s46
    %p53 = scmp.eq.s32.totalorder %s15, 3
    %p54 = por %p52, %p53
    %p55 = scmp.ne.s32.totalorder %s46, %s47
    %p56 = scmp.eq.s32.totalorder %s15, 0
    %p57 = por %p55, %p56
    %p58 = scmp.ne.s32.totalorder %s46, %s47
    %p59 = scmp.eq.s32.totalorder %s16, 3
    %p60 = por %p58, %p59
    %p62 = scmp.ne.s32.totalorder %s47, %s61
    %p63 = scmp.eq.s32.totalorder %s16, 0
    %p64 = por %p62, %p63
    %s65 = ssub.s32 %s10, %s17
    %p66 = scmp.eq.s32.totalorder %s65, 0
    %s68 = sadd.s32 %s67, 1
    %s69 = scalar_select %p66, %s67, %s68
    %p72 = pneg %p66
    %p73 = scmp.eq.s32.totalorder %s10, 3
    %p74 = por %p72, %p73
    %p75 = scmp.ne.s32.totalorder %s67, %s70
    %p76 = scmp.eq.s32.totalorder %s10, 0
    %p77 = por %p75, %p76
    %p78 = scmp.ne.s32.totalorder %s67, %s70
    %p79 = scmp.eq.s32.totalorder %s15, 3
    %p80 = por %p78, %p79
    %p81 = scmp.ne.s32.totalorder %s70, %s71
    %p82 = scmp.eq.s32.totalorder %s15, 0
    %p83 = por %p81, %p82
    %p84 = scmp.ne.s32.totalorder %s70, %s71
    %p85 = scmp.eq.s32.totalorder %s16, 3
    %p86 = por %p84, %p85
    %p88 = scmp.ne.s32.totalorder %s71, %s87
    %p89 = scmp.eq.s32.totalorder %s16, 0
    %p90 = por %p88, %p89
    %s92 = sadd.s32 %s91, 1
    %p95 = scmp.eq.s32.totalorder %s10, 3
    %p96 = scmp.ne.s32.totalorder %s91, %s93
    %p97 = scmp.eq.s32.totalorder %s10, 0
    %p98 = por %p96, %p97
    %p99 = scmp.ne.s32.totalorder %s91, %s93
    %p100 = scmp.eq.s32.totalorder %s15, 3
    %p101 = por %p99, %p100
    %p102 = scmp.ne.s32.totalorder %s93, %s94
    %p103 = scmp.eq.s32.totalorder %s15, 0
    %p104 = por %p102, %p103
    %p105 = scmp.ne.s32.totalorder %s93, %s94
    %p106 = scmp.eq.s32.totalorder %s16, 3
    %p107 = por %p105, %p106
    %p109 = scmp.ne.s32.totalorder %s94, %s108
    %p110 = scmp.eq.s32.totalorder %s16, 0
    %p111 = por %p109, %p110
    %s112 = ssub.s32 %s10, %s17
    %p113 = scmp.eq.s32.totalorder %s112, 0
    %s115 = sadd.s32 %s114, 1
    %s116 = scalar_select %p113, %s114, %s115
    %p119 = pneg %p113
    %p120 = scmp.eq.s32.totalorder %s10, 3
    %p121 = por %p119, %p120
    %p122 = scmp.ne.s32.totalorder %s114, %s117
    %p123 = scmp.eq.s32.totalorder %s10, 0
    %p124 = por %p122, %p123
    %p125 = scmp.ne.s32.totalorder %s114, %s117
    %p126 = scmp.eq.s32.totalorder %s15, 3
    %p127 = por %p125, %p126
    %p128 = scmp.ne.s32.totalorder %s117, %s118
    %p129 = scmp.eq.s32.totalorder %s15, 0
    %p130 = por %p128, %p129
    %p131 = scmp.ne.s32.totalorder %s117, %s118
    %p132 = scmp.eq.s32.totalorder %s16, 3
    %p133 = por %p131, %p132
    %p135 = scmp.ne.s32.totalorder %s118, %s134
    %p136 = scmp.eq.s32.totalorder %s16, 0
    %p137 = por %p135, %p136
    %p138 = scmp.le.s32.totalorder 1, %s10
    %p139 = scmp.lt.s32.totalorder %s10, 5
    %p140 = pnand %p138, %p139
    %p141 = pneg %p140
    // Predicated region
    $region9: #{tpu_custom_call.1} parent=5 // pred_check
      _
    $region10: #{tpu_custom_call.1} parent=5 // pred_check_branch
      %143 = sbr.rel (%p140) target = $region12
    $region11: #{tpu_custom_call.1} parent=5 // pred_region
      %s144 = ssub.s32 %s10, 1
      // Predicated region
      $region13: #{tpu_custom_call.1} parent=11 // pred_check
        %p145 = pneg %p57
      $region14: #{tpu_custom_call.1} parent=11 // pred_check_branch
        %147 = sbr.rel (%p145) target = $region16
      $region15: #{tpu_custom_call.1} parent=11 // pred_region
        _
      $region16: #{tpu_custom_call.1} parent=11 // pred_fallthru
        _
      // Predicated region
      $region17: #{tpu_custom_call.1} parent=11 // pred_check
        %p148 = pneg %p104
      $region18: #{tpu_custom_call.1} parent=11 // pred_check_branch
        %150 = sbr.rel (%p148) target = $region20
      $region19: #{tpu_custom_call.1} parent=11 // pred_region
        _
      $region20: #{tpu_custom_call.1} parent=11 // pred_fallthru
        _
    $region12: #{tpu_custom_call.1} parent=5 // pred_fallthru
      _
    %p151 = scmp.lt.s32.totalorder %s10, 4
    // Predicated region
    $region21: #{tpu_custom_call.1} parent=5 // pred_check
      %p152 = pneg %p151
    $region22: #{tpu_custom_call.1} parent=5 // pred_check_branch
      %154 = sbr.rel (%p152) target = $region24
    $region23: #{tpu_custom_call.1} parent=5 // pred_region
      // Predicated region
      $region25: #{tpu_custom_call.1} parent=23 // pred_check
        %p155 = pneg %p30
      $region26: #{tpu_custom_call.1} parent=23 // pred_check_branch
        %157 = sbr.rel (%p155) target = $region28
      $region27: #{tpu_custom_call.1} parent=23 // pred_region
        %s158 = smul.u32 2, %s10
        %p159 = scmp.lt.s32.totalorder %s158, 7
        %s160 = scalar_select %p159, %s158, 7
        %s161 = smul.addr %s160, 4
        %s162 = scalar_lea.vmem %s0, %s161
        %s163 = smul.u32 2, %s10
      $region28: #{tpu_custom_call.1} parent=23 // pred_fallthru
        _
      // Predicated region
      $region29: #{tpu_custom_call.1} parent=23 // pred_check
        %p164 = pneg %p77
      $region30: #{tpu_custom_call.1} parent=23 // pred_check_branch
        %166 = sbr.rel (%p164) target = $region32
      $region31: #{tpu_custom_call.1} parent=23 // pred_region
        %s167 = smul.u32 2, %s10
        %p168 = scmp.lt.s32.totalorder %s167, 7
        %s169 = scalar_select %p168, %s167, 7
        %s170 = smul.addr %s169, 8
        %s171 = scalar_lea.vmem %s2, %s170
        %s172 = smul.u32 2, %s10
      $region32: #{tpu_custom_call.1} parent=23 // pred_fallthru
        _
    $region24: #{tpu_custom_call.1} parent=5 // pred_fallthru
      _
    %p173 = scmp.le.s32.totalorder 1, %s10
    %p174 = scmp.lt.s32.totalorder %s10, 5
    %p175 = pnand %p173, %p174
    %p176 = pneg %p175
    // Predicated region
    $region33: #{tpu_custom_call.1} parent=5 // pred_check
      _
    $region34: #{tpu_custom_call.1} parent=5 // pred_check_branch
      %178 = sbr.rel (%p175) target = $region36
    $region35: #{tpu_custom_call.1} parent=5 // pred_region
      %s179 = ssub.s32 %s10, 1
      %s180 = smul.u32 2, %s15
      %p181 = scmp.lt.s32.totalorder %s180, 7
      %s182 = scalar_select %p181, %s180, 7
      %s183 = smul.addr %s182, 4
      %s184 = scalar_lea.vmem %s0, %s183
      %p185 = pneg %p36
      %p186 = pneg %p33
      %p187 = pneg %p57
      %p188 = pneg %p54
      %s189 = smul.u32 2, %s15
      %p190 = scmp.lt.s32.totalorder %s189, 7
      %s191 = scalar_select %p190, %s189, 7
      %s192 = smul.addr %s191, 8
      %s193 = scalar_lea.vmem %s2, %s192
      %p194 = pneg %p83
      %p195 = pneg %p80
      %p196 = pneg %p104
      %p197 = pneg %p101
      %p198 = pneg %p130
      %p199 = pneg %p127
      %s200 = smul.u32 2, %s15
      %p201 = scmp.lt.s32.totalorder %s200, 7
      %s202 = scalar_select %p201, %s200, 7
      %s203 = smul.addr %s202, 8
      %s204 = scalar_lea.vmem %s4, %s203
      %s205 = smul.u32 2, %s15
      %p206 = scmp.lt.s32.totalorder %s205, 7
      %s207 = scalar_select %p206, %s205, 7
      %s208 = smul.addr %s207, 4
      %s209 = scalar_lea.vmem %s0, %s208
      %s210 = smul.u32 2, %s15
      %s211 = smul.u32 2, %s15
      %p212 = scmp.lt.s32.totalorder %s211, 7
      %s213 = scalar_select %p212, %s211, 7
      %s214 = smul.addr %s213, 8
      %s215 = scalar_lea.vmem %s2, %s214
      %s216 = smul.u32 2, %s15
      %s217 = smul.u32 2, %s15
      %p218 = scmp.lt.s32.totalorder %s217, 7
      %s219 = scalar_select %p218, %s217, 7
      %s220 = smul.addr %s219, 8
      %s221 = scalar_lea.vmem %s4, %s220
      %s222 = smul.u32 2, %s15
      %s224 = smul.u32 %s15, 16
      %v225 = vld [vmem:[%s209] sm:$0xf]
      %v226 = vld [vmem:[%s209 + $0x4] sm:$0xf]
      %v227 = vld [vmem:[%s1] sm:$0xf]
      %v228 = vld [vmem:[%s1 + $0x4] sm:$0xf]
      %v229 = vld [vmem:[%s1 + $0x8] sm:$0xf]
      %v230 = vld [vmem:[%s1 + $0xc] sm:$0xf]
      %v231 = vld [vmem:[%s1 + $0x10] sm:$0xf]
      %v232 = vld [vmem:[%s1 + $0x14] sm:$0xf]
      %v233 = vld [vmem:[%s1 + $0x18] sm:$0xf]
      %v234 = vld [vmem:[%s1 + $0x1c] sm:$0xf]
      %v237 = vunpack.c.l.b16 %v225
      %v238 = vunpack.c.l.b16 %v226
      %v239 = vpack.c.b16 %v238, %v237
      %v248 = vunpack.c.l.b16 %v227
      %v249 = vunpack.c.l.b16 %v228
      %v250 = vunpack.c.l.b16 %v229
      %v251 = vunpack.c.l.b16 %v230
      %v252 = vunpack.c.l.b16 %v231
      %v253 = vunpack.c.l.b16 %v232
      %v254 = vunpack.c.l.b16 %v233
      %v255 = vunpack.c.l.b16 %v234
      %v256 = vpack.c.b16 %v249, %v248
      %v257 = vpack.c.b16 %v251, %v250
      %v258 = vpack.c.b16 %v253, %v252
      %v259 = vpack.c.b16 %v255, %v254
      %vm260 = vcmask 261120
      %v262 = vsel %vm260, %v239, 0
      %v265 = vsel %vm260, %v256, 0
      %v268 = vsel %vm260, %v257, 0
      %v271 = vsel %vm260, %v258, 0
      %v274 = vsel %vm260, %v259, 0
      %276 = vmatpush.bf16.xpose.msra.mxu0 0
      %277 = vmatpush.bf16.xpose.msra.mxu0 0
      %278 = vmatpush.bf16.xpose.msra.mxu0 0
      %279 = vmatpush.bf16.xpose.msra.mxu0 0
      %280 = vmatpush.bf16.xpose.msra.mxu0 %v274
      %281 = vmatpush.bf16.xpose.msra.mxu0 %v271
      %282 = vmatpush.bf16.xpose.msra.mxu0 %v268
      %283 = vmatpush.bf16.xpose.msra.mxu0 %v265
      %284 = vmatmul.bf16.gmra.mxu0 %v262
      %v285 = vpop.f32.mrf.mxu0
      %v286 = vadd.f32 0.0, %v285
      %v287 = vpop.f32.mrf.mxu0
      %v288 = vadd.f32 0.0, %v287
      %289 = vdwg.mxu0
      %v290 = vld [vmem:[%s215] sm:$0xff]
      %v291 = vld [vmem:[%s215 + $0x8] sm:$0xff]
      %v292 = vld [vmem:[%s3] sm:$0x1]
      %293 = vset.pattern.permute.xlu0 0
      %294 = vperm.xlu0 %293, %v290
      %v295 = vpop.permute.xlu0 %294
      %296 = vset.pattern.permute.xlu0 0
      %297 = vperm.xlu0 %296, %v291
      %v298 = vpop.permute.xlu0 %297
      %v299 = vperm.slane %v292, 0
      %vm300 = vcmp.eq.s32.totalorder %v295, %v299
      %vm301 = vcmp.eq.s32.totalorder %v298, %v299
      %v302 = vlaneseq
      %v303 = vand.u32 %v302, 127
      %v304 = vlaneseq
      %v305 = vshrl.u32 %v304, 7
      %v306 = vadd.s32 %v305, 8
      %v307 = vstv %s224
      %v308 = vadd.s32 %v305, %v307
      %v309 = vadd.s32 %v306, %v307
      %vm310 = vcmp.eq.s32.totalorder %v303, %v308
      %vm311 = vcmp.eq.s32.totalorder %v303, %v309
      %vm312 = vcmp.lt.s32.totalorder %v303, 60
      %vm313 = vmxor %vm310, 1
      %vm314 = vmxor %vm311, 1
      %vm315 = vmand %vm300, %vm313
      %vm316 = vmand %vm301, %vm314
      %vm317 = vmand %vm315, %vm312
      %vm318 = vmand %vm316, %vm312
      %vm319 = vmxor %vm300, 1
      %vm320 = vmxor %vm301, 1
      %vm321 = vmand %vm319, %vm312
      %vm322 = vmand %vm320, %vm312
      %v323 = vmul.f32 %v286, %v286
      %v324 = vmul.f32 %v288, %v288
      %v325 = vsel %vm317, 1.0, 0.0
      %v326 = vsel %vm318, 1.0, 0.0
      %vm327 = vcmask 523264
      %v328 = vsel %vm327, %v325, 0.0
      %329 = vadd.xlane.f32.xlu0 %v328
      %v330 = vpop.xlane.xlu0 %329
      %v331 = vsel %vm327, %v326, 0.0
      %332 = vadd.xlane.f32.xlu0 %v331
      %v333 = vpop.xlane.xlu0 %332
      %v334 = vsel %vm321, 1.0, 0.0
      %v335 = vsel %vm322, 1.0, 0.0
      %v336 = vsel %vm327, %v334, 0.0
      %337 = vadd.xlane.f32.xlu0 %v336
      %v338 = vpop.xlane.xlu0 %337
      %v339 = vsel %vm327, %v335, 0.0
      %340 = vadd.xlane.f32.xlu0 %v339
      %v341 = vpop.xlane.xlu0 %340
      %v342 = vsel %vm317, %v286, 0.0
      %v343 = vsel %vm318, %v288, 0.0
      %v344 = vsel %vm327, %v342, 0.0
      %345 = vadd.xlane.f32.xlu0 %v344
      %v346 = vpop.xlane.xlu0 %345
      %v347 = vsel %vm327, %v343, 0.0
      %348 = vadd.xlane.f32.xlu0 %v347
      %v349 = vpop.xlane.xlu0 %348
      %v350 = vsel %vm321, %v286, 0.0
      %v351 = vsel %vm322, %v288, 0.0
      %v352 = vsel %vm327, %v350, 0.0
      %353 = vadd.xlane.f32.xlu0 %v352
      %v354 = vpop.xlane.xlu0 %353
      %v355 = vsel %vm327, %v351, 0.0
      %356 = vadd.xlane.f32.xlu0 %v355
      %v357 = vpop.xlane.xlu0 %356
      %v358 = vsel %vm317, %v323, 0.0
      %v359 = vsel %vm318, %v324, 0.0
      %v360 = vsel %vm327, %v358, 0.0
      %361 = vadd.xlane.f32.xlu0 %v360
      %v362 = vpop.xlane.xlu0 %361
      %v363 = vsel %vm327, %v359, 0.0
      %364 = vadd.xlane.f32.xlu0 %v363
      %v365 = vpop.xlane.xlu0 %364
      %v366 = vsel %vm321, %v323, 0.0
      %v367 = vsel %vm322, %v324, 0.0
      %v368 = vsel %vm327, %v366, 0.0
      %369 = vadd.xlane.f32.xlu0 %v368
      %v370 = vpop.xlane.xlu0 %369
      %v371 = vsel %vm327, %v367, 0.0
      %372 = vadd.xlane.f32.xlu0 %v371
      %v373 = vpop.xlane.xlu0 %372
      %v374 = vmax.f32 %v330, 1.0
      %v375 = vmax.f32 %v333, 1.0
      %v376 = vmax.f32 %v338, 1.0
      %v377 = vmax.f32 %v341, 1.0
      %v378 = vrcp.pop %v374
      %v379 = vmul.f32 %v374, %v378
      %v380 = vsub.f32 1.0, %v379
      %v381 = vmul.f32 %v378, %v380
      %v382 = vadd.f32 %v378, %v381
      %vm383 = vweird.f32 %v374
      %vm384 = vweird.f32 %v378
      %vm385 = vmor %vm383, %vm384
      %v386 = vsel %vm385, %v378, %v382
      %v387 = vand.u32 2147483647, %v374
      %vm388 = vcmp.eq.f32.partialorder %v387, 8.507059e+37
      %v389 = vand.u32 %v374, 2147483648
      %v390 = vor.u32 1.1754944e-38, %v389
      %v391 = vsel %vm388, %v390, %v386
      %v392 = vmul.f32 %v346, %v391
      %v393 = vrcp.pop %v375
      %v394 = vmul.f32 %v375, %v393
      %v395 = vsub.f32 1.0, %v394
      %v396 = vmul.f32 %v393, %v395
      %v397 = vadd.f32 %v393, %v396
      %vm398 = vweird.f32 %v375
      %vm399 = vweird.f32 %v393
      %vm400 = vmor %vm398, %vm399
      %v401 = vsel %vm400, %v393, %v397
      %v402 = vand.u32 2147483647, %v375
      %vm403 = vcmp.eq.f32.partialorder %v402, 8.507059e+37
      %v404 = vand.u32 %v375, 2147483648
      %v405 = vor.u32 1.1754944e-38, %v404
      %v406 = vsel %vm403, %v405, %v401
      %v407 = vmul.f32 %v349, %v406
      %v408 = vrcp.pop %v376
      %v409 = vmul.f32 %v376, %v408
      %v410 = vsub.f32 1.0, %v409
      %v411 = vmul.f32 %v408, %v410
      %v412 = vadd.f32 %v408, %v411
      %vm413 = vweird.f32 %v376
      %vm414 = vweird.f32 %v408
      %vm415 = vmor %vm413, %vm414
      %v416 = vsel %vm415, %v408, %v412
      %v417 = vand.u32 2147483647, %v376
      %vm418 = vcmp.eq.f32.partialorder %v417, 8.507059e+37
      %v419 = vand.u32 %v376, 2147483648
      %v420 = vor.u32 1.1754944e-38, %v419
      %v421 = vsel %vm418, %v420, %v416
      %v422 = vmul.f32 %v354, %v421
      %v423 = vrcp.pop %v377
      %v424 = vmul.f32 %v377, %v423
      %v425 = vsub.f32 1.0, %v424
      %v426 = vmul.f32 %v423, %v425
      %v427 = vadd.f32 %v423, %v426
      %vm428 = vweird.f32 %v377
      %vm429 = vweird.f32 %v423
      %vm430 = vmor %vm428, %vm429
      %v431 = vsel %vm430, %v423, %v427
      %v432 = vand.u32 2147483647, %v377
      %vm433 = vcmp.eq.f32.partialorder %v432, 8.507059e+37
      %v434 = vand.u32 %v377, 2147483648
      %v435 = vor.u32 1.1754944e-38, %v434
      %v436 = vsel %vm433, %v435, %v431
      %v437 = vmul.f32 %v357, %v436
      %v438 = vmul.f32 %v362, %v391
      %v439 = vmul.f32 %v365, %v406
      %v440 = vmul.f32 %v392, %v392
      %v441 = vmul.f32 %v407, %v407
      %v442 = vsub.f32 %v438, %v440
      %v443 = vsub.f32 %v439, %v441
      %v444 = vmax.f32 %v442, 0.0
      %v445 = vmax.f32 %v443, 0.0
      %v446 = vrsqrt.pop %v444
      %v447 = vmul.f32 %v446, %v444
      %v448 = vmul.f32 %v447, %v446
      %v449 = vmul.f32 0.5, %v448
      %v450 = vsub.f32 1.5, %v449
      %v451 = vmul.f32 %v446, %v450
      %v452 = vmul.f32 %v444, %v451
      %vm453 = vcmp.eq.f32.partialorder %v444, inf
      %v454 = vsel %vm453, %v444, %v452
      %vm455 = vcmp.eq.f32.partialorder %v444, 0.0
      %v456 = vand.u32 %v444, 2147483648
      %v457 = vsel %vm455, %v456, %v454
      %v458 = vrsqrt.pop %v445
      %v459 = vmul.f32 %v458, %v445
      %v460 = vmul.f32 %v459, %v458
      %v461 = vmul.f32 0.5, %v460
      %v462 = vsub.f32 1.5, %v461
      %v463 = vmul.f32 %v458, %v462
      %v464 = vmul.f32 %v445, %v463
      %vm465 = vcmp.eq.f32.partialorder %v445, inf
      %v466 = vsel %vm465, %v445, %v464
      %vm467 = vcmp.eq.f32.partialorder %v445, 0.0
      %v468 = vand.u32 %v445, 2147483648
      %v469 = vsel %vm467, %v468, %v466
      %v470 = vmul.f32 %v370, %v421
      %v471 = vmul.f32 %v373, %v436
      %v472 = vmul.f32 %v422, %v422
      %v473 = vmul.f32 %v437, %v437
      %v474 = vsub.f32 %v470, %v472
      %v475 = vsub.f32 %v471, %v473
      %v476 = vmax.f32 %v474, 0.0
      %v477 = vmax.f32 %v475, 0.0
      %v478 = vrsqrt.pop %v476
      %v479 = vmul.f32 %v478, %v476
      %v480 = vmul.f32 %v479, %v478
      %v481 = vmul.f32 0.5, %v480
      %v482 = vsub.f32 1.5, %v481
      %v483 = vmul.f32 %v478, %v482
      %v484 = vmul.f32 %v476, %v483
      %vm485 = vcmp.eq.f32.partialorder %v476, inf
      %v486 = vsel %vm485, %v476, %v484
      %vm487 = vcmp.eq.f32.partialorder %v476, 0.0
      %v488 = vand.u32 %v476, 2147483648
      %v489 = vsel %vm487, %v488, %v486
      %v490 = vrsqrt.pop %v477
      %v491 = vmul.f32 %v490, %v477
      %v492 = vmul.f32 %v491, %v490
      %v493 = vmul.f32 0.5, %v492
      %v494 = vsub.f32 1.5, %v493
      %v495 = vmul.f32 %v490, %v494
      %v496 = vmul.f32 %v477, %v495
      %vm497 = vcmp.eq.f32.partialorder %v477, inf
      %v498 = vsel %vm497, %v477, %v496
      %vm499 = vcmp.eq.f32.partialorder %v477, 0.0
      %v500 = vand.u32 %v477, 2147483648
      %v501 = vsel %vm499, %v500, %v498
      %v502 = vadd.f32 %v457, %v489
      %v503 = vadd.f32 %v469, %v501
      %vm504 = vcmp.gt.f32.partialorder %v502, 0.0
      %vm505 = vcmp.gt.f32.partialorder %v503, 0.0
      %v506 = vsel %vm504, %v502, 1.0
      %v507 = vsel %vm505, %v503, 1.0
      %v508 = vmul.f32 %v489, %v392
      %v509 = vmul.f32 %v501, %v407
      %v510 = vmul.f32 %v457, %v422
      %v511 = vmul.f32 %v469, %v437
      %v512 = vadd.f32 %v508, %v510
      %v513 = vadd.f32 %v509, %v511
      %v514 = vrcp.pop %v506
      %v515 = vmul.f32 %v506, %v514
      %v516 = vsub.f32 1.0, %v515
      %v517 = vmul.f32 %v514, %v516
      %v518 = vadd.f32 %v514, %v517
      %vm519 = vweird.f32 %v506
      %vm520 = vweird.f32 %v514
      %vm521 = vmor %vm519, %vm520
      %v522 = vsel %vm521, %v514, %v518
      %v523 = vand.u32 2147483647, %v506
      %vm524 = vcmp.eq.f32.partialorder %v523, 8.507059e+37
      %v525 = vand.u32 %v506, 2147483648
      %v526 = vor.u32 1.1754944e-38, %v525
      %v527 = vsel %vm524, %v526, %v522
      %v528 = vmul.f32 %v512, %v527
      %v529 = vrcp.pop %v507
      %v530 = vmul.f32 %v507, %v529
      %v531 = vsub.f32 1.0, %v530
      %v532 = vmul.f32 %v529, %v531
      %v533 = vadd.f32 %v529, %v532
      %vm534 = vweird.f32 %v507
      %vm535 = vweird.f32 %v529
      %vm536 = vmor %vm534, %vm535
      %v537 = vsel %vm536, %v529, %v533
      %v538 = vand.u32 2147483647, %v507
      %vm539 = vcmp.eq.f32.partialorder %v538, 8.507059e+37
      %v540 = vand.u32 %v507, 2147483648
      %v541 = vor.u32 1.1754944e-38, %v540
      %v542 = vsel %vm539, %v541, %v537
      %v543 = vmul.f32 %v513, %v542
      %v544 = vmul.f32 %v528, 0.8
      %v545 = vmul.f32 %v543, 0.8
      %v546 = vadd.f32 %v544, 0.1
      %v547 = vadd.f32 %v545, 0.1
      %v548 = vsub.f32 %v286, %v546
      %v549 = vsub.f32 %v288, %v547
      %v550 = vand.u32 2147483647, %v548
      %v551 = vand.u32 2147483647, %v549
      %v552 = vmul.f32 %v550, -10.0
      %v553 = vmul.f32 %v551, -10.0
      %v554 = vmul.f32 %v552, 1.442695
      %v555 = vpow.pop %v554
      %v556 = vmul.f32 %v553, 1.442695
      %v557 = vpow.pop %v556
      %v558 = vmul.f32 %v555, %v555
      %v559 = vmul.f32 %v557, %v557
      %v560 = vmul.f32 %v558, %v558
      %v561 = vmul.f32 %v559, %v559
      %v562 = vmul.f32 %v548, -10.0
      %v563 = vmul.f32 %v549, -10.0
      %v564 = vmax.f32 %v562, 0.0
      %v565 = vmax.f32 %v563, 0.0
      %v566 = vadd.f32 %v555, 1.0
      %v567 = vadd.f32 %v557, 1.0
      %v568 = vlog2.pop %v566
      %v569 = vmul.f32 %v568, 0.6931472
      %v570 = vlog2.pop %v567
      %v571 = vmul.f32 %v570, 0.6931472
      %v572 = vadd.f32 %v564, %v569
      %v573 = vadd.f32 %v565, %v571
      %v574 = vmul.f32 %v548, 40.0
      %v575 = vmul.f32 %v549, 40.0
      %v576 = vmax.f32 %v574, 0.0
      %v577 = vmax.f32 %v575, 0.0
      %v578 = vadd.f32 %v560, 1.0
      %v579 = vadd.f32 %v561, 1.0
      %v580 = vlog2.pop %v578
      %v581 = vmul.f32 %v580, 0.6931472
      %v582 = vlog2.pop %v579
      %v583 = vmul.f32 %v582, 0.6931472
      %v584 = vadd.f32 %v576, %v581
      %v585 = vadd.f32 %v577, %v583
      %v586 = vsel %vm317, %v286, inf
      %v587 = vsel %vm318, %v288, inf
      %v588 = vsel %vm327, %v586, inf
      %589 = vmin.xlane.f32.xlu0 %v588
      %v590 = vpop.xlane.xlu0 %589
      %v591 = vsel %vm327, %v587, inf
      %592 = vmin.xlane.f32.xlu0 %v591
      %v593 = vpop.xlane.xlu0 %592
      %v594 = vsub.f32 %v590, 0.05
      %v595 = vsub.f32 %v593, 0.05
      %vm596 = vcmp.gt.f32.partialorder %v286, %v594
      %vm597 = vcmp.gt.f32.partialorder %v288, %v595
      %vm598 = vmand %vm321, %vm596
      %vm599 = vmand %vm322, %vm597
      %v600 = vsel %vm598, 1.0, 0.0
      %v601 = vsel %vm599, 1.0, 0.0
      %v602 = vsel %vm327, %v600, 0.0
      %603 = vadd.xlane.f32.xlu0 %v602
      %v604 = vpop.xlane.xlu0 %603
      %v605 = vsel %vm327, %v601, 0.0
      %606 = vadd.xlane.f32.xlu0 %v605
      %v607 = vpop.xlane.xlu0 %606
      %v608 = vmax.f32 %v604, 1.0
      %v609 = vmax.f32 %v607, 1.0
      %v610 = vsel %vm317, %v572, 0.0
      %v611 = vsel %vm318, %v573, 0.0
      %v612 = vsel %vm327, %v610, 0.0
      %613 = vadd.xlane.f32.xlu0 %v612
      %v614 = vpop.xlane.xlu0 %613
      %v615 = vsel %vm327, %v611, 0.0
      %616 = vadd.xlane.f32.xlu0 %v615
      %v617 = vpop.xlane.xlu0 %616
      %v618 = vmul.f32 %v614, 0.2
      %v619 = vmul.f32 %v617, 0.2
      %v620 = vmul.f32 %v618, %v391
      %v621 = vmul.f32 %v619, %v406
      %v622 = vsel %vm598, %v584, 0.0
      %v623 = vsel %vm599, %v585, 0.0
      %v624 = vsel %vm327, %v622, 0.0
      %625 = vadd.xlane.f32.xlu0 %v624
      %v626 = vpop.xlane.xlu0 %625
      %v627 = vsel %vm327, %v623, 0.0
      %628 = vadd.xlane.f32.xlu0 %v627
      %v629 = vpop.xlane.xlu0 %628
      %v630 = vmul.f32 %v626, 0.05
      %v631 = vmul.f32 %v629, 0.05
      %v632 = vrcp.pop %v608
      %v633 = vmul.f32 %v608, %v632
      %v634 = vsub.f32 1.0, %v633
      %v635 = vmul.f32 %v632, %v634
      %v636 = vadd.f32 %v632, %v635
      %vm637 = vweird.f32 %v608
      %vm638 = vweird.f32 %v632
      %vm639 = vmor %vm637, %vm638
      %v640 = vsel %vm639, %v632, %v636
      %v641 = vand.u32 2147483647, %v608
      %vm642 = vcmp.eq.f32.partialorder %v641, 8.507059e+37
      %v643 = vand.u32 %v608, 2147483648
      %v644 = vor.u32 1.1754944e-38, %v643
      %v645 = vsel %vm642, %v644, %v640
      %v646 = vmul.f32 %v630, %v645
      %v647 = vrcp.pop %v609
      %v648 = vmul.f32 %v609, %v647
      %v649 = vsub.f32 1.0, %v648
      %v650 = vmul.f32 %v647, %v649
      %v651 = vadd.f32 %v647, %v650
      %vm652 = vweird.f32 %v609
      %vm653 = vweird.f32 %v647
      %vm654 = vmor %vm652, %vm653
      %v655 = vsel %vm654, %v647, %v651
      %v656 = vand.u32 2147483647, %v609
      %vm657 = vcmp.eq.f32.partialorder %v656, 8.507059e+37
      %v658 = vand.u32 %v609, 2147483648
      %v659 = vor.u32 1.1754944e-38, %v658
      %v660 = vsel %vm657, %v659, %v655
      %v661 = vmul.f32 %v631, %v660
      %vm662 = vcmp.lt.s32.totalorder %v308, 60
      %vm663 = vcmp.lt.s32.totalorder %v309, 60
      %vm664 = vcmp.gt.f32.partialorder %v330, 0.0
      %vm665 = vcmp.gt.f32.partialorder %v333, 0.0
      %vm666 = vmand %vm662, %vm664
      %vm667 = vmand %vm663, %vm665
      %vm668 = vcmp.gt.f32.partialorder %v338, 0.0
      %vm669 = vcmp.gt.f32.partialorder %v341, 0.0
      %vm670 = vmand %vm666, %vm668
      %vm671 = vmand %vm667, %vm669
      %v672 = vadd.f32 %v620, %v646
      %v673 = vadd.f32 %v621, %v661
      %v674 = vsel %vm670, %v672, 0.0
      %v675 = vsel %vm671, %v673, 0.0
      %vm676 = vcmask 7168
      %677 = vst.msk [vmem:[%s221] sm:$0xff] %vm676, %v674
      %678 = vst.msk [vmem:[%s221 + $0x8] sm:$0xff] %vm676, %v675
      %s679 = smul.u32 2, %s15
      %p680 = scmp.lt.s32.totalorder %s679, 7
      %s681 = scalar_select %p680, %s679, 7
      %s682 = smul.addr %s681, 8
      %s683 = scalar_lea.vmem %s4, %s682
      // Predicated region
      $region37: #{tpu_custom_call.1} parent=35 // pred_check
        %p684 = pneg %p127
      $region38: #{tpu_custom_call.1} parent=35 // pred_check_branch
        %686 = sbr.rel (%p684) target = $region40
      $region39: #{tpu_custom_call.1} parent=35 // pred_region
        %s687 = smul.u32 2, %s15
      $region40: #{tpu_custom_call.1} parent=35 // pred_fallthru
        _
    $region36: #{tpu_custom_call.1} parent=5 // pred_fallthru
      _
    %p688 = scmp.le.s32.totalorder 2, %s10
    // Predicated region
    $region41: #{tpu_custom_call.1} parent=5 // pred_check
      %p689 = pneg %p688
    $region42: #{tpu_custom_call.1} parent=5 // pred_check_branch
      %691 = sbr.rel (%p689) target = $region44
    $region43: #{tpu_custom_call.1} parent=5 // pred_region
      %s692 = ssub.s32 %s10, 2
      // Predicated region
      $region45: #{tpu_custom_call.1} parent=43 // pred_check
        %p693 = pneg %p133
      $region46: #{tpu_custom_call.1} parent=43 // pred_check_branch
        %695 = sbr.rel (%p693) target = $region48
      $region47: #{tpu_custom_call.1} parent=43 // pred_region
        %s696 = smul.u32 2, %s16
        %p697 = scmp.lt.s32.totalorder %s696, 7
        %s698 = scalar_select %p697, %s696, 7
        %s699 = smul.addr %s698, 8
        %s700 = scalar_lea.vmem %s4, %s699
      $region48: #{tpu_custom_call.1} parent=43 // pred_fallthru
        _
    $region44: #{tpu_custom_call.1} parent=5 // pred_fallthru
      _
  $region6: #{tpu_custom_call.1} parent=0 // loop_footer
    %s14 = sadd.s32 1, %s10
  $region7: #{tpu_custom_call.1} parent=0 // loop_footer_branch
    %9 = sbr.rel target = $region3
  $region8: #{tpu_custom_call.1} parent=0 // loop_exit
    _

</llo_original>
